<compile_context>
chip_gen: v7x
topology: tpu7x:2x2x1
jax: 0.10.0
libtpu: 0.0.40
codegen_flags: <defaults>
</compile_context>

<pallas_src>
import functools

import jax
import jax.numpy as jnp
from jax.experimental import pallas as pl
from jax.experimental.pallas import tpu as pltpu


def _round_up(n, m):
    return ((n + m - 1) // m) * m


def gaussian_layer_kernel(x_ref, w_ref, b_ref, out_ref, *, o):
    x = x_ref[...]                                                  # (TB, F)
    # One fused MXU matmul for both heads, f32 accumulation.
    y = jnp.dot(x, w_ref[...], preferred_element_type=jnp.float32)
    y = y + b_ref[...]                                              # (TB, W)

    # Numerically stable softplus (f32): max(y,0) + log1p(exp(-|y|)).
    sp = jnp.maximum(y, 0.0) + jnp.log1p(jnp.exp(-jnp.abs(y))) + 1e-6

    # Lane mask: cols [0,o) are the mu head (identity), cols >= o get softplus.
    col = jax.lax.broadcasted_iota(jnp.int32, y.shape, 1)
    out_ref[...] = jnp.where(col >= o, sp, y).astype(out_ref.dtype)


def fuse_params(w1, b1, w2, b2, dtype=None):
    """Pack PyTorch-layout params (O, F) / (O,) into one fused weight slab
    (F, W) with W = round_up(2*O, 128): mu columns [0,O), sigma columns
    [O, 2*O), zero padding after.  Bias packed the same way as (1, W).
    Do this ONCE at init, not per forward call.  Pass dtype=jnp.bfloat16 to
    store weights in bf16 (f32 accumulation preserved in the kernel)."""
    O, F = w1.shape
    W = _round_up(2 * O, 128)
    dt = dtype if dtype is not None else w1.dtype
    w_fused = jnp.zeros((F, W), dt)
    w_fused = w_fused.at[:, :O].set(w1.T.astype(dt))
    w_fused = w_fused.at[:, O:2 * O].set(w2.T.astype(dt))
    b_fused = jnp.zeros((1, W), dt)
    b_fused = b_fused.at[0, :O].set(b1.astype(dt))
    b_fused = b_fused.at[0, O:2 * O].set(b2.astype(dt))
    return w_fused, b_fused


@functools.partial(jax.jit, static_argnums=(3,))
def gaussian_layer(x, w_fused, b_fused, output_dim):
    """x: (B, F). w_fused: (F, W), b_fused: (1, W) from fuse_params.
    Returns [mu, sig_pos], each (B, output_dim), f32."""
    B, F = x.shape
    W = w_fused.shape[1]
    x = x.astype(w_fused.dtype)  # matmul inputs share dtype (f32 or bf16)

    # Batch tile: big enough to amortize per-step overhead, multiple of 8,
    # capped so the grid has >= 2 steps when B allows (v7x: 2 TensorCores).
    TB = min(2048, max(8, _round_up(pl.cdiv(B, 2), 8)))
    grid = (pl.cdiv(B, TB),)  # ragged last tile: Pallas masks the OOB store

    # VMEM budget from the actual tile footprint (+ generous headroom),
    # capped at v7x's 64 MiB per-core VMEM.
    in_item = jnp.dtype(x.dtype).itemsize
    tile_bytes = (2 * TB * F * in_item          # x tile, double-buffered
                  + 2 * (F + 1) * W * in_item   # resident weight + bias
                  + 2 * TB * W * 4)             # f32 output tile, double-buffered
    vmem_limit = min(max(2 * tile_bytes, 16 << 20), 64 << 20)

    out = pl.pallas_call(
        functools.partial(gaussian_layer_kernel, o=output_dim),
        out_shape=jax.ShapeDtypeStruct((B, W), jnp.float32),
        grid=grid,
        in_specs=[
            pl.BlockSpec((TB, F), lambda i: (i, 0)),      # x: batch-tiled
            pl.BlockSpec((F, W), lambda i: (0, 0)),       # fused weights resident
            pl.BlockSpec((1, W), lambda i: (0, 0)),       # fused bias resident
        ],
        out_specs=pl.BlockSpec((TB, W), lambda i: (i, 0)),
        compiler_params=pltpu.CompilerParams(
            dimension_semantics=("parallel",),            # shard grid on v7x TCs
            vmem_limit_bytes=vmem_limit,
        ),
    )(x, w_fused, b_fused)

    # Column slices of the packed slab (no batch padding to strip).  If a
    # downstream consumer can handle the packed (B, W) layout directly, return
    # `out` instead to avoid this slice copy.
    return [out[:, :output_dim], out[:, output_dim:2 * output_dim]]


def init_params(key, output_dim, input_shape):
    """Mirror the PyTorch module init: xavier_normal_ with
    gain=calculate_gain('relu')=sqrt(2), zero biases."""
    k1, k2 = jax.random.split(key)
    gain = jnp.sqrt(2.0)
    std = gain * jnp.sqrt(2.0 / (input_shape + output_dim))
    w1 = std * jax.random.normal(k1, (output_dim, input_shape), jnp.float32)
    w2 = std * jax.random.normal(k2, (output_dim, input_shape), jnp.float32)
    b1 = jnp.zeros((output_dim,), jnp.float32)
    b2 = jnp.zeros((output_dim,), jnp.float32)
    return w1, b1, w2, b2


if __name__ == "__main__":
    key = jax.random.PRNGKey(0)
    kx, kp = jax.random.split(key)

    batch = 8
    input_shape = 32
    output_dim = 16

    x = jax.random.normal(kx, (batch, input_shape), jnp.float32)
    w1, b1, w2, b2 = init_params(kp, output_dim, input_shape)

    # One-time parameter packing (transpose + fuse + lane-pad to one slab).
    w_fused, b_fused = fuse_params(w1, b1, w2, b2)

    mu, sig_pos = gaussian_layer(x, w_fused, b_fused, output_dim)
    jax.block_until_ready(mu)
    jax.block_until_ready(sig_pos)

    # Reference check (plain JAX, stable softplus).
    mu_ref = x @ w1.T + b1
    sig_ref = jax.nn.softplus(x @ w2.T + b2) + 1e-6
    assert mu.shape == (batch, output_dim) and sig_pos.shape == (batch, output_dim)
    assert jnp.allclose(mu, mu_ref, atol=1e-5, rtol=1e-5)
    assert jnp.allclose(sig_pos, sig_ref, atol=1e-5, rtol=1e-5)

    print("KERNEL_OK")
</pallas_src>

<mosaic_0001>
module attributes {stable_mosaic.version = 11 : i64} {
  func.func @gaussian_layer_kernel(%arg0: i32, %arg1: memref<8x32xf32, #tpu.memory_space<vmem>>, %arg2: memref<32x128xf32, #tpu.memory_space<vmem>>, %arg3: memref<1x128xf32, #tpu.memory_space<vmem>>, %arg4: memref<8x128xf32, #tpu.memory_space<vmem>>) attributes {dimension_semantics = [#tpu.dimension_semantics<parallel>], iteration_bounds = array<i64: 1>, scalar_prefetch = 0 : i64, scratch_operands = 0 : i64, tpu.core_type = #tpu.core_type<tc>, window_params = [{transform_indices = @transform_0, window_bounds = array<i64: 8, 32>}, {pipeline_mode = #tpu.pipeline_mode<synchronous>, transform_indices = @transform_1, window_bounds = array<i64: 32, 128>}, {pipeline_mode = #tpu.pipeline_mode<synchronous>, transform_indices = @transform_2, window_bounds = array<i64: 1, 128>}, {transform_indices = @transform_3, window_bounds = array<i64: 8, 128>}]} {
    %c0 = arith.constant 0 : index
    %c0_0 = arith.constant 0 : index
    %0 = vector.load %arg1[%c0, %c0_0] : memref<8x32xf32, #tpu.memory_space<vmem>>, vector<8x32xf32>
    %c0_1 = arith.constant 0 : index
    %c0_2 = arith.constant 0 : index
    %1 = vector.load %arg2[%c0_1, %c0_2] : memref<32x128xf32, #tpu.memory_space<vmem>>, vector<32x128xf32>
    %cst = arith.constant dense<0.000000e+00> : vector<8x128xf32>
    %2 = tpu.matmul %0, %1, %cst {dimension_numbers = #tpu.dot_dimension_numbers<[1], [0], [0], [1], [0, 0, 1, 1], [], []>} : vector<8x32xf32>, vector<32x128xf32>, vector<8x128xf32> -> vector<8x128xf32>
    %c0_3 = arith.constant 0 : index
    %c0_4 = arith.constant 0 : index
    %3 = vector.load %arg3[%c0_3, %c0_4] : memref<1x128xf32, #tpu.memory_space<vmem>>, vector<1x128xf32>
    %4 = vector.broadcast %3 : vector<1x128xf32> to vector<8x128xf32>
    %5 = arith.addf %2, %4 : vector<8x128xf32>
    %cst_5 = arith.constant 0.000000e+00 : f32
    %6 = vector.broadcast %cst_5 : f32 to vector<8x128xf32>
    %7 = arith.maximumf %5, %6 : vector<8x128xf32>
    %8 = math.absf %5 : vector<8x128xf32>
    %cst_6 = arith.constant 0.000000e+00 : f32
    %9 = vector.broadcast %cst_6 : f32 to vector<8x128xf32>
    %10 = arith.subf %9, %8 : vector<8x128xf32>
    %11 = math.exp %10 : vector<8x128xf32>
    %12 = math.log1p %11 : vector<8x128xf32>
    %13 = arith.addf %7, %12 : vector<8x128xf32>
    %cst_7 = arith.constant 9.99999997E-7 : f32
    %14 = vector.broadcast %cst_7 : f32 to vector<8x128xf32>
    %15 = arith.addf %13, %14 : vector<8x128xf32>
    %16 = tpu.iota {dimensions = array<i32: 1>} : vector<8x128xi32>
    %c16_i32 = arith.constant 16 : i32
    %17 = vector.broadcast %c16_i32 : i32 to vector<8x128xi32>
    %18 = arith.cmpi sge, %16, %17 : vector<8x128xi32>
    %19 = arith.select %18, %15, %5 : vector<8x128xi1>, vector<8x128xf32>
    %c0_8 = arith.constant 0 : index
    %c0_9 = arith.constant 0 : index
    %20 = vector.load %arg4[%c0_8, %c0_9] : memref<8x128xf32, #tpu.memory_space<vmem>>, vector<8x128xf32>
    tpu.vector_store %arg4[%c0_8, %c0_9], %19 {strides = array<i32>} : memref<8x128xf32, #tpu.memory_space<vmem>>, vector<8x128xf32>,
    return
  }
  func.func @transform_0(%arg0: i32) -> (i32, i32) {
    %c0_i32 = arith.constant 0 : i32
    %c0_i32_0 = arith.constant 0 : i32
    return %arg0, %c0_i32 : i32, i32
  }
  func.func @transform_1(%arg0: i32) -> (i32, i32) {
    %c0_i32 = arith.constant 0 : i32
    %c0_i32_0 = arith.constant 0 : i32
    %c0_i32_1 = arith.constant 0 : i32
    return %c0_i32, %c0_i32_0 : i32, i32
  }
  func.func @transform_2(%arg0: i32) -> (i32, i32) {
    %c0_i32 = arith.constant 0 : i32
    %c0_i32_0 = arith.constant 0 : i32
    %c0_i32_1 = arith.constant 0 : i32
    return %c0_i32, %c0_i32_0 : i32, i32
  }
  func.func @transform_3(%arg0: i32) -> (i32, i32) {
    %c0_i32 = arith.constant 0 : i32
    %c0_i32_0 = arith.constant 0 : i32
    return %arg0, %c0_i32 : i32, i32
  }
}

</mosaic_0001>

<llo_original>
// kernel: gaussian_layer.1
$region0: #{gaussian_layer.1}
  #allocation0 [shape = 'u32[]', space=smem, size = 0x4, offset = 0x4, fixed_abs, tag = 'smem constant byte address 0x4 - core index']
  #allocation1 [shape = 'u32[144,128]{1,0:T(1,128)}', space=vmem, size = 0x12000, scoped, tag = 'internal scratch']
  %s0 = inlined_call_operand.hbm [shape: f32[8,32], index: 0, kind: input, shape index: {}]
  %s1 = inlined_call_operand.hbm [shape: f32[32,128], index: 1, kind: input, shape index: {}]
  %s2 = inlined_call_operand.vmem [shape: f32[1,128], index: 2, kind: input, shape index: {}]
  %s3 = inlined_call_operand.vmem [shape: f32[8,128], index: 3, kind: output, shape index: {}]
  %s4 = sld [smem:[#allocation0]]
  $region30: #{gaussian_layer.1} parent=0
    _
  %s6 = ssub.s32 1, %s4
  %s7 = scalar_select 0, %s6, %s4
  $region1: #{gaussian_layer.1} parent=0
    #allocation2 [shape = 'u8[4096]{0}', space=vmem, size = 0x1000, scoped, tag = 'input window, operand 0, single buffered']
    #allocation3 [shape = 's32[1]{0}', space=sflag, size = 0x4, scoped, tag = 'scoped memory for gaussian_layer.1']
    #allocation4 [shape = 'u8[16384]{0}', space=vmem, size = 0x4000, scoped, tag = 'input window, operand 1, single buffered']
    #allocation5 [shape = 's32[1]{0}', space=sflag, size = 0x4, scoped, tag = 'scoped memory for gaussian_layer.1']
    %8 = vsyncpa [#allocation3], 0
    %9 = vsyncpa [#allocation5], 0
    // Predicated region
    $region2: #{gaussian_layer.1} parent=1 // pred_check
      _
    $region3: #{gaussian_layer.1} parent=1 // pred_check_branch
      %11 = sbr.rel (0) target = $region5
    $region4: #{gaussian_layer.1} parent=1 // pred_region
      %s13 = ssub.s32 128, 128
      %14 = vsyncadd [#allocation3], %s13
      %s16 = sshll.u32 [#allocation2], 4
      %s17 = int_to_ptr.vmem [resolvable:$true] %s16
      %19 = dma.hbm_to_vmem [thread:$0]  %s0, 128, %s17, [#allocation3]
    $region5: #{gaussian_layer.1} parent=1 // pred_fallthru
      _
    // Predicated region
    $region6: #{gaussian_layer.1} parent=1 // pred_check
      _
    $region7: #{gaussian_layer.1} parent=1 // pred_check_branch
      %21 = sbr.rel (0) target = $region9
    $region8: #{gaussian_layer.1} parent=1 // pred_region
      %s23 = ssub.s32 512, 512
      %24 = vsyncadd [#allocation5], %s23
      %s25 = sshll.u32 [#allocation4], 4
      %s26 = int_to_ptr.vmem [resolvable:$true] %s25
      %31 = dma.hbm_to_vmem [thread:$0]  %s1, 512, %s26, [#allocation5], 128, 128, 8
    $region9: #{gaussian_layer.1} parent=1 // pred_fallthru
      _
    // Predicated region
    $region10: #{gaussian_layer.1} parent=1 // pred_check
      _
    $region11: #{gaussian_layer.1} parent=1 // pred_check_branch
      %33 = sbr.rel (0) target = $region13
    $region12: #{gaussian_layer.1} parent=1 // pred_region
      _
    $region13: #{gaussian_layer.1} parent=1 // pred_fallthru
      _
    // Predicated region
    $region14: #{gaussian_layer.1} parent=1 // pred_check
      _
    $region15: #{gaussian_layer.1} parent=1 // pred_check_branch
      %35 = sbr.rel (0) target = $region17
    $region16: #{gaussian_layer.1} parent=1 // pred_region
      %36 = dma.done [#allocation3], 128
    $region17: #{gaussian_layer.1} parent=1 // pred_fallthru
      _
    // Predicated region
    $region18: #{gaussian_layer.1} parent=1 // pred_check
      _
    $region19: #{gaussian_layer.1} parent=1 // pred_check_branch
      %38 = sbr.rel (0) target = $region21
    $region20: #{gaussian_layer.1} parent=1 // pred_region
      %39 = dma.done [#allocation5], 512
    $region21: #{gaussian_layer.1} parent=1 // pred_fallthru
      _
    %v40 = vld [vmem:[#allocation2] sm:$0xff]
    %v41 = vld [vmem:[#allocation4] sm:$0xff]
    %v42 = vld [vmem:[#allocation4 + $0x8] sm:$0xff]
    %v43 = vld [vmem:[#allocation4 + $0x10] sm:$0xff]
    %v44 = vld [vmem:[#allocation4 + $0x18] sm:$0xff]
    %v45 = vld [vmem:[%s2] sm:$0x1]
    %v47 = vlaneseq
    %v48 = vshrl.u32 %v47, 7
    %v49 = vsub.s32 0, %v48
    %v50 = vrot.slane %v45, %v49
    %vm52 = vcmask 261120
    %v54 = vsel %vm52, %v40, 0
    %56 = vmatprep.subr.mxu0 0.0
    %57 = vmatpush1.msra.mxu0 %v41
    %58 = vmatprep.subr.mxu0 0.0
    %59 = vmatpush1.msra.mxu0 %v42
    %60 = vmatprep.subr.mxu0 0.0
    %61 = vmatpush1.msra.mxu0 %v43
    %62 = vmatprep.subr.mxu0 0.0
    %63 = vmatpush1.msra.mxu0 %v44
    %64 = vmatprep.subr.mxu0 0.0
    %65 = vmatpush1.msra.mxu0 0.0
    %66 = vmatprep.subr.mxu0 0.0
    %67 = vmatpush1.msra.mxu0 0.0
    %68 = vmatprep.subr.mxu0 0.0
    %69 = vmatpush1.msra.mxu0 0.0
    %70 = vmatprep.subr.mxu0 0.0
    %71 = vmatpush1.msra.mxu0 0.0
    %72 = vmatprep.subr.mxu0 0.0
    %73 = vmatpush1.msra.mxu0 0.0
    %74 = vmatprep.subr.mxu0 0.0
    %75 = vmatpush1.msra.mxu0 0.0
    %76 = vmatprep.subr.mxu0 0.0
    %77 = vmatpush1.msra.mxu0 0.0
    %78 = vmatprep.subr.mxu0 0.0
    %79 = vmatpush1.msra.mxu0 0.0
    %80 = vmatprep.subr.mxu0 0.0
    %81 = vmatpush1.msra.mxu0 0.0
    %82 = vmatprep.subr.mxu0 0.0
    %83 = vmatpush1.msra.mxu0 0.0
    %84 = vmatprep.subr.mxu0 0.0
    %85 = vmatpush1.msra.mxu0 0.0
    %86 = vmatprep.subr.mxu0 0.0
    %87 = vmatpush1.msra.mxu0 0.0
    %88 = vmatprep.subr.mxu0 0.0
    %89 = vmatpush1.msra.mxu0 0.0
    %90 = vmatprep.subr.mxu0 0.0
    %91 = vmatpush1.msra.mxu0 0.0
    %92 = vmatprep.subr.mxu0 0.0
    %93 = vmatpush1.msra.mxu0 0.0
    %94 = vmatprep.subr.mxu0 0.0
    %95 = vmatpush1.msra.mxu0 0.0
    %96 = vmatprep.subr.mxu0 0.0
    %97 = vmatpush1.msra.mxu0 0.0
    %98 = vmatprep.subr.mxu0 0.0
    %99 = vmatpush1.msra.mxu0 0.0
    %100 = vmatprep.subr.mxu0 0.0
    %101 = vmatpush1.msra.mxu0 0.0
    %102 = vmatprep.subr.mxu0 0.0
    %103 = vmatpush1.msra.mxu0 0.0
    %104 = vmatprep.subr.mxu0 0.0
    %105 = vmatpush1.msra.mxu0 0.0
    %106 = vmatprep.subr.mxu0 0.0
    %107 = vmatpush1.msra.mxu0 0.0
    %108 = vmatprep.subr.mxu0 0.0
    %109 = vmatpush1.msra.mxu0 0.0
    %110 = vmatprep.subr.mxu0 0.0
    %111 = vmatpush1.msra.mxu0 0.0
    %112 = vmatprep.subr.mxu0 0.0
    %113 = vmatpush1.msra.mxu0 0.0
    %114 = vmatprep.subr.mxu0 0.0
    %115 = vmatpush1.msra.mxu0 0.0
    %116 = vmatprep.subr.mxu0 0.0
    %117 = vmatpush1.msra.mxu0 0.0
    %118 = vmatprep.subr.mxu0 0.0
    %119 = vmatpush1.msra.mxu0 0.0
    %120 = vmatprep.mubr.f32.mxu0 0.0
    %121 = vmatmul.mubr.f32.gmra.mrb[0].mxu0 %v54
    %v122 = vpop.f32.mrb[0].mxu0
    %v123 = vadd.f32 %v50, %v122
    %v124 = vpop.f32.mrb[0].mxu0
    %125 = vdwg.mxu0
    %v126 = vmax.f32 %v123, 0.0
    %v127 = vand.u32 2147483647, %v123
    %v128 = vsub.f32 0.0, %v127
    %v129 = vmul.f32 %v128, 1.442695
    %v130 = vpow.pop %v129
    %v131 = vadd.f32 %v130, 1.0
    %v132 = vlog2.pop %v131
    %v133 = vmul.f32 %v132, 0.6931472
    %v134 = vmul.f32 -0.5, %v130
    %v135 = vadd.f32 %v134, 1.0
    %v136 = vmul.f32 %v135, %v130
    %v137 = vand.u32 2147483647, %v130
    %vm138 = vcmp.lt.f32.partialorder %v137, 0.0004427343
    %v139 = vsel %vm138, %v136, %v133
    %v140 = vadd.f32 %v126, %v139
    %v141 = vadd.f32 %v140, 1e-06
    %v142 = vlaneseq
    %v143 = vand.u32 %v142, 127
    %vm144 = vcmp.ge.s32.totalorder %v143, 16
    %v145 = vsel %vm144, %v141, %v123
    %146 = vst [vmem:[%s3] sm:$0xff] %v145
    // Predicated region
    $region22: #{gaussian_layer.1} parent=1 // pred_check
      _
    $region23: #{gaussian_layer.1} parent=1 // pred_check_branch
      %148 = sbr.rel (0) target = $region25
    $region24: #{gaussian_layer.1} parent=1 // pred_region
      _
    $region25: #{gaussian_layer.1} parent=1 // pred_fallthru
      _
    // Predicated region
    $region26: #{gaussian_layer.1} parent=1 // pred_check
      _
    $region27: #{gaussian_layer.1} parent=1 // pred_check_branch
      %150 = sbr.rel (0) target = $region29
    $region28: #{gaussian_layer.1} parent=1 // pred_region
      _
    $region29: #{gaussian_layer.1} parent=1 // pred_fallthru
      _
    %151 = vsyncpa [#allocation3], 1
    %152 = vsyncpa [#allocation5], 1

</llo_original>
